<compile_context>
chip_gen: v7x
topology: tpu7x:2x2x1
jax: 0.10.0
libtpu: 0.0.40
codegen_flags: <defaults>
</compile_context>

<pallas_src>
import functools
import math

import jax
import jax.numpy as jnp
from jax import lax
from jax.experimental import pallas as pl
from jax.experimental.pallas import tpu as pltpu


# ----------------------------- kernel bodies --------------------------------

def _attention_tile(q, k, v, m, mxu_dtype, attn_store_dtype):
    """Attention math for one q-tile.

    q: (TQ, D), k/v: (S, D), m: None or (TQ|1, S|1) integer mask (0 == drop).
    Returns (out (TQ, D) f32, attn_store (TQ, S) in attn_store_dtype).
    """
    d_k = q.shape[-1]
    scale = 1.0 / math.sqrt(float(d_k))

    # Scale in f32, then a single cast to the MXU operand dtype (bf16 for f32
    # inputs by default); accumulation stays f32 on the MXU.
    qs = (q.astype(jnp.float32) * jnp.float32(scale)).astype(mxu_dtype)
    ks = k.astype(mxu_dtype)

    # scores = q @ k^T without materializing a transposed k tile: contract on
    # the last dim of both operands.
    scores = lax.dot_general(
        qs, ks,
        dimension_numbers=(((1,), (1,)), ((), ())),
        preferred_element_type=jnp.float32)                  # (TQ, S) f32

    if m is not None:
        # masked_fill(mask == 0, -1e9); integer compare + select (no f32 unpack
        # of the mask tile).  Broadcasts (1, S) / (TQ, 1) as needed.
        scores = jnp.where(m == 0, jnp.float32(-1.0e9), scores)

    # Numerically-stable softmax with an exact normalization (rows sum to 1,
    # matching torch.softmax).
    smax = jnp.max(scores, axis=-1, keepdims=True)
    e = jnp.exp(scores - smax)
    denom = jnp.sum(e, axis=-1, keepdims=True)
    attn_f32 = e / denom

    # Single narrow cast of the (TQ, S) tile, reused for the PV matmul operand
    # and (when the dtypes match) the attn store.
    attn_mxu = attn_f32.astype(mxu_dtype)
    out = jnp.dot(attn_mxu, v.astype(mxu_dtype),
                  preferred_element_type=jnp.float32)        # (TQ, D) f32

    if jnp.dtype(attn_store_dtype) == jnp.dtype(mxu_dtype):
        attn_store = attn_mxu
    else:
        attn_store = attn_f32.astype(attn_store_dtype)
    return out, attn_store


def _sdpa_kernel(q_ref, k_ref, v_ref, out_ref, attn_ref, *, mxu_dtype):
    out, attn = _attention_tile(q_ref[0, 0], k_ref[0, 0], v_ref[0, 0],
                                None, mxu_dtype, attn_ref.dtype)
    out_ref[0, 0] = out.astype(out_ref.dtype)
    attn_ref[0, 0] = attn


def _sdpa_kernel_masked(q_ref, k_ref, v_ref, m_ref, out_ref, attn_ref, *,
                        mxu_dtype):
    out, attn = _attention_tile(q_ref[0, 0], k_ref[0, 0], v_ref[0, 0],
                                m_ref[0, 0], mxu_dtype, attn_ref.dtype)
    out_ref[0, 0] = out.astype(out_ref.dtype)
    attn_ref[0, 0] = attn


# ----------------------------- tiling helpers --------------------------------

def _vmem_capacity_bytes():
    try:
        return int(pltpu.get_tpu_info().vmem_capacity_bytes)
    except Exception:
        return 64 * 1024 * 1024   # conservative: v7x per-TensorCore VMEM


def _choose_q_tile(S, D, in_itemsize, out_itemsize, attn_itemsize,
                   vmem_limit, masked):
    """Largest q-tile whose per-step working set fits the VMEM budget."""
    if S <= 256:
        return S   # block equals full dim -> always layout-legal

    def step_bytes(tq):
        q = tq * D * in_itemsize
        kv = 2 * S * D * in_itemsize           # resident K + V slabs
        msk = tq * S if masked else 0          # int8 mask tile
        o = tq * D * out_itemsize
        a = tq * S * attn_itemsize
        f32_tmp = 3 * tq * S * 4               # scores / exp / attn f32 temps
        # q/out/attn/mask are double-buffered by the pipeline; K/V also get two
        # buffers -- count everything twice to stay conservative.
        return 2 * (q + kv + msk + o + a) + f32_tmp

    budget = int(vmem_limit * 0.6)
    # 256/512 preferred for the v6e/v7x 2x256x256 MXU; 128 works everywhere
    # (and is the better choice for v5e's 4x128x128 MXU anyway).
    for tq in (512, 256, 128):
        if tq <= S and S % tq == 0 and step_bytes(tq) <= budget:
            return tq
    for tq in (512, 256, 128):                 # padded last tile via cdiv
        if tq < S and step_bytes(tq) <= budget:
            return tq
    # TODO(synk): if even TQ=128 blows the budget the resident K/V slab is the
    # problem; that needs an online-softmax K-tile inner loop.
    return 128


# ----------------------------- public wrapper --------------------------------

@functools.partial(jax.jit,
                   static_argnames=("attn_dtype", "prefer_bf16_matmul"))
def scale_dot_product_attention(query, key, value, mask=None, *,
                                attn_dtype=None, prefer_bf16_matmul=True):
    """query/key/value: (B, H, S, D).  mask: optional, 0 == masked out,
    broadcastable to (B, H, S, S).  Returns (output, attn).  Dropout is
    identity (eval mode).

    attn_dtype: dtype of the returned attention matrix (default query.dtype;
      pass jnp.bfloat16 to halve the dominant HBM writeback stream).
    prefer_bf16_matmul: feed the bf16-native MXU bf16 operands when inputs are
      f32 (f32 accumulation).  Set False for full f32 operand precision.
    """
    B, H, S, D = query.shape
    out_dtype = jnp.dtype(query.dtype)
    attn_out_dtype = out_dtype if attn_dtype is None else jnp.dtype(attn_dtype)

    if prefer_bf16_matmul and out_dtype == jnp.dtype(jnp.float32):
        mxu_dtype = jnp.dtype(jnp.bfloat16)
    else:
        mxu_dtype = out_dtype

    in_itemsize = out_dtype.itemsize
    out_itemsize = out_dtype.itemsize
    attn_itemsize = attn_out_dtype.itemsize

    masked = mask is not None
    vmem_cap = _vmem_capacity_bytes()
    vmem_limit = int(min(0.8 * vmem_cap, 100 * 1024 * 1024))
    TQ = _choose_q_tile(S, D, in_itemsize, out_itemsize, attn_itemsize,
                        vmem_limit, masked)
    n_q = pl.cdiv(S, TQ)

    q_spec = pl.BlockSpec((1, 1, TQ, D), lambda b, h, i: (b, h, i, 0))
    kv_spec = pl.BlockSpec((1, 1, S, D), lambda b, h, i: (b, h, 0, 0))
    out_spec = pl.BlockSpec((1, 1, TQ, D), lambda b, h, i: (b, h, i, 0))
    attn_spec = pl.BlockSpec((1, 1, TQ, S), lambda b, h, i: (b, h, i, 0))

    out_shape = (
        jax.ShapeDtypeStruct((B, H, S, D), out_dtype),
        jax.ShapeDtypeStruct((B, H, S, S), attn_out_dtype),
    )

    flops = 4 * B * H * S * S * D                       # QK^T + PV matmuls
    transcendentals = B * H * S * S                     # exp
    bytes_accessed = (3 * B * H * S * D * in_itemsize   # q, k, v reads
                      + B * H * S * D * out_itemsize    # out write
                      + B * H * S * S * attn_itemsize)  # attn write

    compiler_params = pltpu.CompilerParams(
        # q-tile axis is "arbitrary": megacore (v7x) shards over B/H only, so
        # the resident K/V slab is fetched once per (b, h) per core.
        dimension_semantics=("parallel", "parallel", "arbitrary"),
        vmem_limit_bytes=vmem_limit,
    )

    if not masked:
        return pl.pallas_call(
            functools.partial(_sdpa_kernel, mxu_dtype=mxu_dtype),
            out_shape=out_shape,
            grid_spec=pltpu.PrefetchScalarGridSpec(
                num_scalar_prefetch=0,
                grid=(B, H, n_q),
                in_specs=[q_spec, kv_spec, kv_spec],
                out_specs=[out_spec, attn_spec],
            ),
            compiler_params=compiler_params,
            cost_estimate=pl.CostEstimate(
                flops=flops, transcendentals=transcendentals,
                bytes_accessed=bytes_accessed),
        )(query, key, value)

    # ---------------- masked path: int8 mask, broadcastable shape -----------
    mask = jnp.asarray(mask)
    if mask.ndim > 4:
        raise ValueError(f"mask rank must be <= 4, got shape {mask.shape}")
    if mask.ndim < 4:
        mask = mask.reshape((1,) * (4 - mask.ndim) + mask.shape)
    mB, mH, mQ, mK = mask.shape
    if (mB not in (1, B) or mH not in (1, H) or mQ not in (1, S)
            or mK not in (1, S)):
        raise ValueError(
            f"mask shape {mask.shape} not broadcastable to ({B},{H},{S},{S})")

    # Narrow to 1 byte/elem of DMA; skip the pass if already narrow.
    if mask.dtype == jnp.dtype(jnp.int8):
        mask_i8 = mask
    elif mask.dtype == jnp.dtype(jnp.bool_):
        mask_i8 = mask.astype(jnp.int8)
    else:
        mask_i8 = (mask != 0).astype(jnp.int8)

    # Advisory traffic estimate: broadcast mask blocks are re-fetched per
    # (batch, head) they broadcast over.
    mask_reads = int(mask_i8.size)
    if mH == 1 and H > 1:
        mask_reads *= H
    if mB == 1 and B > 1:
        mask_reads *= B
    bytes_accessed += mask_reads

    m_q_blk = TQ if mQ == S else 1
    m_k_blk = S if mK == S else 1

    def m_index(b, h, i):
        return (b if mB > 1 else 0,
                h if mH > 1 else 0,
                i if mQ > 1 else 0,
                0)

    m_spec = pl.BlockSpec((1, 1, m_q_blk, m_k_blk), m_index)

    return pl.pallas_call(
        functools.partial(_sdpa_kernel_masked, mxu_dtype=mxu_dtype),
        out_shape=out_shape,
        grid_spec=pltpu.PrefetchScalarGridSpec(
            num_scalar_prefetch=0,
            grid=(B, H, n_q),
            in_specs=[q_spec, kv_spec, kv_spec, m_spec],
            out_specs=[out_spec, attn_spec],
        ),
        compiler_params=compiler_params,
        cost_estimate=pl.CostEstimate(
            flops=flops, transcendentals=transcendentals,
            bytes_accessed=bytes_accessed),
    )(query, key, value, mask_i8)


# --------------------------------- test --------------------------------------

def _reference(query, key, value, mask=None):
    d_k = query.shape[-1]
    scores = jnp.einsum("bhqd,bhkd->bhqk",
                        query.astype(jnp.float32),
                        key.astype(jnp.float32)) / math.sqrt(float(d_k))
    if mask is not None:
        scores = jnp.where(mask == 0, jnp.float32(-1.0e9), scores)
    attn = jax.nn.softmax(scores, axis=-1)
    out = jnp.einsum("bhqk,bhkd->bhqd", attn, value.astype(jnp.float32))
    return out, attn


if __name__ == "__main__":
    B, H, S, D = 2, 4, 8, 32
    root = jax.random.PRNGKey(0)
    kq, kk, kv, km = jax.random.split(root, 4)
    query = jax.random.normal(kq, (B, H, S, D), dtype=jnp.float32)
    key_ = jax.random.normal(kk, (B, H, S, D), dtype=jnp.float32)
    value = jax.random.normal(kv, (B, H, S, D), dtype=jnp.float32)

    # Tolerance covers bf16 MXU operands (f32 accumulation) in the kernel and
    # default-precision einsum in the reference.
    atol = rtol = 2e-2

    def close(a, b):
        return bool(jnp.allclose(jnp.asarray(a, jnp.float32),
                                 jnp.asarray(b, jnp.float32),
                                 atol=atol, rtol=rtol))

    # 1) maskless path, default (bf16 MXU operands).
    out0, attn0 = scale_dot_product_attention(query, key_, value, None)
    jax.block_until_ready((out0, attn0))
    r_out0, r_attn0 = _reference(query, key_, value, None)
    assert close(out0, r_out0), "maskless output mismatch"
    assert close(attn0, r_attn0), "maskless attn mismatch"

    # 2) maskless path, full f32 operand precision.
    out0f, attn0f = scale_dot_product_attention(query, key_, value, None,
                                                prefer_bf16_matmul=False)
    jax.block_until_ready((out0f, attn0f))
    assert close(out0f, r_out0), "f32-precision output mismatch"
    assert close(attn0f, r_attn0), "f32-precision attn mismatch"

    # 3) broadcastable (B, 1, S, S) int32 mask (exercises int8 narrowing).
    mask_b = (jax.random.uniform(km, (B, 1, S, S)) > 0.2).astype(jnp.int32)
    out1, attn1 = scale_dot_product_attention(query, key_, value, mask_b)
    jax.block_until_ready((out1, attn1))
    r_out1, r_attn1 = _reference(query, key_, value, mask_b)
    assert close(out1, r_out1), "broadcast-mask output mismatch"
    assert close(attn1, r_attn1), "broadcast-mask attn mismatch"

    # 4) full (B, H, S, S) bool mask (exercises the no-conversion fast path).
    mask_f = jnp.broadcast_to(mask_b != 0, (B, H, S, S))
    out2, attn2 = scale_dot_product_attention(query, key_, value, mask_f)
    jax.block_until_ready((out2, attn2))
    r_out2, r_attn2 = _reference(query, key_, value, mask_f)
    assert close(out2, r_out2), "full-mask output mismatch"
    assert close(attn2, r_attn2), "full-mask attn mismatch"

    print("KERNEL_OK")
</pallas_src>

<mosaic_0001>
module attributes {stable_mosaic.version = 11 : i64} {
  func.func @_sdpa_kernel(%arg0: i32, %arg1: i32, %arg2: i32, %arg3: memref<1x1x8x32xf32, #tpu.memory_space<vmem>>, %arg4: memref<1x1x8x32xf32, #tpu.memory_space<vmem>>, %arg5: memref<1x1x8x32xf32, #tpu.memory_space<vmem>>, %arg6: memref<1x1x8x32xf32, #tpu.memory_space<vmem>>, %arg7: memref<1x1x8x8xf32, #tpu.memory_space<vmem>>) attributes {dimension_semantics = [#tpu.dimension_semantics<parallel>, #tpu.dimension_semantics<parallel>, #tpu.dimension_semantics<arbitrary>], iteration_bounds = array<i64: 2, 4, 1>, scalar_prefetch = 0 : i64, scratch_operands = 0 : i64, tpu.core_type = #tpu.core_type<tc>, window_params = [{transform_indices = @transform_0, window_bounds = array<i64: 1, 1, 8, 32>}, {transform_indices = @transform_1, window_bounds = array<i64: 1, 1, 8, 32>}, {transform_indices = @transform_2, window_bounds = array<i64: 1, 1, 8, 32>}, {transform_indices = @transform_3, window_bounds = array<i64: 1, 1, 8, 32>}, {transform_indices = @transform_4, window_bounds = array<i64: 1, 1, 8, 8>}]} {
    %c0 = arith.constant 0 : index
    %c0_0 = arith.constant 0 : index
    %c0_1 = arith.constant 0 : index
    %c0_2 = arith.constant 0 : index
    %0 = vector.load %arg3[%c0, %c0_0, %c0_1, %c0_2] : memref<1x1x8x32xf32, #tpu.memory_space<vmem>>, vector<1x1x8x32xf32>
    %1 = vector.shape_cast %0 : vector<1x1x8x32xf32> to vector<8x32xf32>
    %c0_3 = arith.constant 0 : index
    %c0_4 = arith.constant 0 : index
    %c0_5 = arith.constant 0 : index
    %c0_6 = arith.constant 0 : index
    %2 = vector.load %arg4[%c0_3, %c0_4, %c0_5, %c0_6] : memref<1x1x8x32xf32, #tpu.memory_space<vmem>>, vector<1x1x8x32xf32>
    %3 = vector.shape_cast %2 : vector<1x1x8x32xf32> to vector<8x32xf32>
    %c0_7 = arith.constant 0 : index
    %c0_8 = arith.constant 0 : index
    %c0_9 = arith.constant 0 : index
    %c0_10 = arith.constant 0 : index
    %4 = vector.load %arg5[%c0_7, %c0_8, %c0_9, %c0_10] : memref<1x1x8x32xf32, #tpu.memory_space<vmem>>, vector<1x1x8x32xf32>
    %5 = vector.shape_cast %4 : vector<1x1x8x32xf32> to vector<8x32xf32>
    %cst = arith.constant 0.176776692 : f32
    %6 = vector.broadcast %cst : f32 to vector<8x32xf32>
    %7 = arith.mulf %1, %6 : vector<8x32xf32>
    %8 = arith.truncf %7 : vector<8x32xf32> to vector<8x32xbf16>
    %9 = arith.truncf %3 : vector<8x32xf32> to vector<8x32xbf16>
    %cst_11 = arith.constant dense<0.000000e+00> : vector<8x8xf32>
    %10 = tpu.matmul %8, %9, %cst_11 {dimension_numbers = #tpu.dot_dimension_numbers<[1], [1], [0], [0], [0, 0, 1, 0], [], []>} : vector<8x32xbf16>, vector<8x32xbf16>, vector<8x8xf32> -> vector<8x8xf32>
    %cst_12 = arith.constant dense<0xFF800000> : vector<8xf32>
    %11 = vector.multi_reduction <maximumf>, %10, %cst_12 [1] : vector<8x8xf32> to vector<8xf32>
    %12 = vector.shape_cast %11 : vector<8xf32> to vector<8x1xf32>
    %13 = vector.broadcast %12 : vector<8x1xf32> to vector<8x8xf32>
    %14 = arith.subf %10, %13 : vector<8x8xf32>
    %15 = math.exp %14 : vector<8x8xf32>
    %cst_13 = arith.constant dense<0.000000e+00> : vector<8xf32>
    %16 = vector.multi_reduction <add>, %15, %cst_13 [1] : vector<8x8xf32> to vector<8xf32>
    %17 = vector.shape_cast %16 : vector<8xf32> to vector<8x1xf32>
    %18 = vector.broadcast %17 : vector<8x1xf32> to vector<8x8xf32>
    %19 = arith.divf %15, %18 : vector<8x8xf32>
    %20 = arith.truncf %19 : vector<8x8xf32> to vector<8x8xbf16>
    %21 = arith.truncf %5 : vector<8x32xf32> to vector<8x32xbf16>
    %cst_14 = arith.constant dense<0.000000e+00> : vector<8x32xf32>
    %22 = tpu.matmul %20, %21, %cst_14 {dimension_numbers = #tpu.dot_dimension_numbers<[1], [0], [0], [1], [0, 0, 1, 1], [], []>} : vector<8x8xbf16>, vector<8x32xbf16>, vector<8x32xf32> -> vector<8x32xf32>
    %c0_15 = arith.constant 0 : index
    %c0_16 = arith.constant 0 : index
    %c0_17 = arith.constant 0 : index
    %c0_18 = arith.constant 0 : index
    %23 = vector.load %arg6[%c0_15, %c0_16, %c0_17, %c0_18] : memref<1x1x8x32xf32, #tpu.memory_space<vmem>>, vector<1x1x8x32xf32>
    %24 = vector.shape_cast %23 : vector<1x1x8x32xf32> to vector<8x32xf32>
    %25 = vector.shape_cast %22 : vector<8x32xf32> to vector<1x1x8x32xf32>
    tpu.vector_store %arg6[%c0_15, %c0_16, %c0_17, %c0_18], %25 {strides = array<i32>} : memref<1x1x8x32xf32, #tpu.memory_space<vmem>>, vector<1x1x8x32xf32>,
    %c0_19 = arith.constant 0 : index
    %c0_20 = arith.constant 0 : index
    %c0_21 = arith.constant 0 : index
    %c0_22 = arith.constant 0 : index
    %26 = vector.load %arg7[%c0_19, %c0_20, %c0_21, %c0_22] : memref<1x1x8x8xf32, #tpu.memory_space<vmem>>, vector<1x1x8x8xf32>
    %27 = vector.shape_cast %26 : vector<1x1x8x8xf32> to vector<8x8xf32>
    %28 = vector.shape_cast %19 : vector<8x8xf32> to vector<1x1x8x8xf32>
    tpu.vector_store %arg7[%c0_19, %c0_20, %c0_21, %c0_22], %28 {strides = array<i32>} : memref<1x1x8x8xf32, #tpu.memory_space<vmem>>, vector<1x1x8x8xf32>,
    return
  }
  func.func @transform_0(%arg0: i32, %arg1: i32, %arg2: i32) -> (i32, i32, i32, i32) {
    %c0_i32 = arith.constant 0 : i32
    %c0_i32_0 = arith.constant 0 : i32
    return %arg0, %arg1, %arg2, %c0_i32 : i32, i32, i32, i32
  }
  func.func @transform_1(%arg0: i32, %arg1: i32, %arg2: i32) -> (i32, i32, i32, i32) {
    %c0_i32 = arith.constant 0 : i32
    %c0_i32_0 = arith.constant 0 : i32
    %c0_i32_1 = arith.constant 0 : i32
    return %arg0, %arg1, %c0_i32, %c0_i32_0 : i32, i32, i32, i32
  }
  func.func @transform_2(%arg0: i32, %arg1: i32, %arg2: i32) -> (i32, i32, i32, i32) {
    %c0_i32 = arith.constant 0 : i32
    %c0_i32_0 = arith.constant 0 : i32
    %c0_i32_1 = arith.constant 0 : i32
    return %arg0, %arg1, %c0_i32, %c0_i32_0 : i32, i32, i32, i32
  }
  func.func @transform_3(%arg0: i32, %arg1: i32, %arg2: i32) -> (i32, i32, i32, i32) {
    %c0_i32 = arith.constant 0 : i32
    %c0_i32_0 = arith.constant 0 : i32
    return %arg0, %arg1, %arg2, %c0_i32 : i32, i32, i32, i32
  }
  func.func @transform_4(%arg0: i32, %arg1: i32, %arg2: i32) -> (i32, i32, i32, i32) {
    %c0_i32 = arith.constant 0 : i32
    %c0_i32_0 = arith.constant 0 : i32
    return %arg0, %arg1, %arg2, %c0_i32 : i32, i32, i32, i32
  }
}

</mosaic_0001>

<llo_original>
// kernel: scale_dot_product_attention.1
$region0: #{scale_dot_product_attention.1}
  #allocation0 [shape = 'u32[]', space=smem, size = 0x4, offset = 0x4, fixed_abs, tag = 'smem constant byte address 0x4 - core index']
  #allocation1 [shape = 'u32[144,128]{1,0:T(1,128)}', space=vmem, size = 0x12000, scoped, tag = 'internal scratch']
  %s0 = inlined_call_operand.hbm [shape: f32[2,4,8,32], index: 0, kind: input, shape index: {}]
  %s1 = inlined_call_operand.hbm [shape: f32[2,4,8,32], index: 1, kind: input, shape index: {}]
  %s2 = inlined_call_operand.hbm [shape: f32[2,4,8,32], index: 2, kind: input, shape index: {}]
  %s3 = inlined_call_operand.hbm [shape: f32[2,4,8,32], index: 3, kind: output, shape index: {0}]
  %s4 = inlined_call_operand.hbm [shape: f32[2,4,8,8], index: 4, kind: output, shape index: {1}]
  %5 = xla_tuple %s3, %s4
  %s6 = sld [smem:[#allocation0]]
  $region65: #{scale_dot_product_attention.1} parent=0
    _
  %s8 = ssub.s32 1, %s6
  %s9 = scalar_select 0, %s8, %s6
  $region1: #{scale_dot_product_attention.1} parent=0
    #allocation2 [shape = 'u8[8192]{0}', space=vmem, size = 0x2000, scoped, tag = 'input window, operand 0']
    #allocation3 [shape = 's32[2]{0}', space=sflag, size = 0x8, scoped, tag = 'scoped memory for scale_dot_product_attention.1']
    #allocation4 [shape = 's32[2]{0}', space=sflag, size = 0x8, scoped, tag = 'scoped memory for scale_dot_product_attention.1']
    #allocation5 [shape = 'u8[8192]{0}', space=vmem, size = 0x2000, scoped, tag = 'input window, operand 1']
    #allocation6 [shape = 's32[2]{0}', space=sflag, size = 0x8, scoped, tag = 'scoped memory for scale_dot_product_attention.1']
    #allocation7 [shape = 'u8[8192]{0}', space=vmem, size = 0x2000, scoped, tag = 'input window, operand 2']
    #allocation8 [shape = 'u8[8192]{0}', space=vmem, size = 0x2000, scoped, tag = 'output window, operand 0']
    #allocation9 [shape = 'u8[8192]{0}', space=vmem, size = 0x2000, scoped, tag = 'output window, operand 1']
    #allocation10 [shape = 's32[2]{0}', space=sflag, size = 0x8, scoped, tag = 'scoped memory for scale_dot_product_attention.1']
    %10 = vsyncpa [#allocation3], 0
    %s11 = scalar_lea.sflag [#allocation3], 1
    %12 = vsyncpa %s11, 0
    %13 = vsyncpa [#allocation6], 0
    %s14 = scalar_lea.sflag [#allocation6], 1
    %15 = vsyncpa %s14, 0
    %16 = vsyncpa [#allocation4], 0
    %s17 = scalar_lea.sflag [#allocation4], 1
    %18 = vsyncpa %s17, 0
    %19 = vsyncpa [#allocation10], 0
    %s20 = scalar_lea.sflag [#allocation10], 1
    %21 = vsyncpa %s20, 0
    loop: start=0, step=1, limit=10
    $region2: #{scale_dot_product_attention.1} parent=1 // loop_pre_header
      _
    $region3: #{scale_dot_product_attention.1} parent=1 // loop_header
      %s23 = sphi 0, %s27
      %p24 = scmp.ge.s32.totalorder %s23, 10
      %s30 = sphi 0, %s49
      %s31 = sphi 0, %s45
      %s32 = sphi 0, %s41
      %s33 = sphi 0, %s30
      %s34 = sphi 0, %s31
      %s35 = sphi 0, %s32
      %s36 = sphi 0, %s33
      %s37 = sphi 0, %s34
      %s38 = sphi 0, %s35
      %s56 = sphi 0, %s58
      %s59 = sphi 0, %s56
      %s60 = sphi 0, %s59
      %s76 = sphi 0, %s60
      %s84 = sphi 0, %s86
      %s87 = sphi 0, %s84
      %s88 = sphi 0, %s87
      %s104 = sphi 0, %s88
      %s112 = sphi 0, %s114
      %s115 = sphi 0, %s112
      %s116 = sphi 0, %s115
      %s132 = sphi 0, %s116
      %s142 = sphi 0, %s144
      %s145 = sphi 0, %s142
      %s146 = sphi 0, %s145
      %s162 = sphi 0, %s146
      %s172 = sphi 0, %s174
      %s175 = sphi 0, %s172
      %s176 = sphi 0, %s175
      %s192 = sphi 0, %s176
    $region4: #{scale_dot_product_attention.1} parent=1 // loop_header_branch
      %26 = sbr.rel (%p24) target = $region8
    $region5: #{scale_dot_product_attention.1} parent=1 // loop_body
      %s28 = ssub.s32 %s23, 1
      %s29 = ssub.s32 %s23, 2
      %s39 = sadd.s32 1, %s32
      %p40 = scmp.ge.s32.totalorder %s39, 1
      %s41 = scalar_select %p40, 0, %s39
      %s42 = sadd.s32 1, %s31
      %s43 = scalar_select %p40, %s42, %s31
      %p44 = scmp.ge.s32.totalorder %s43, 4
      %s45 = scalar_select %p44, 0, %s43
      %s46 = sadd.s32 1, %s30
      %s47 = scalar_select %p44, %s46, %s30
      %p48 = scmp.ge.s32.totalorder %s47, 2
      %s49 = scalar_select %p48, 0, %s47
      %s50 = ssub.s32 %s30, %s49
      %s51 = ssub.s32 %s31, %s45
      %s52 = sor.u32 %s50, %s51
      %s53 = ssub.s32 %s32, %s41
      %s54 = sor.u32 %s52, %s53
      %p55 = scmp.eq.s32.totalorder %s54, 0
      %s57 = sadd.s32 %s56, 1
      %s58 = scalar_select %p55, %s56, %s57
      %p61 = pneg %p55
      %p62 = scmp.eq.s32.totalorder %s23, 7
      %p63 = por %p61, %p62
      %p64 = scmp.ne.s32.totalorder %s56, %s59
      %p65 = scmp.eq.s32.totalorder %s23, 0
      %p66 = por %p64, %p65
      %p67 = scmp.ne.s32.totalorder %s56, %s59
      %p68 = scmp.eq.s32.totalorder %s28, 7
      %p69 = por %p67, %p68
      %p70 = scmp.ne.s32.totalorder %s59, %s60
      %p71 = scmp.eq.s32.totalorder %s28, 0
      %p72 = por %p70, %p71
      %p73 = scmp.ne.s32.totalorder %s59, %s60
      %p74 = scmp.eq.s32.totalorder %s29, 7
      %p75 = por %p73, %p74
      %p77 = scmp.ne.s32.totalorder %s60, %s76
      %p78 = scmp.eq.s32.totalorder %s29, 0
      %p79 = por %p77, %p78
      %s80 = ssub.s32 %s30, %s49
      %s81 = ssub.s32 %s31, %s45
      %s82 = sor.u32 %s80, %s81
      %p83 = scmp.eq.s32.totalorder %s82, 0
      %s85 = sadd.s32 %s84, 1
      %s86 = scalar_select %p83, %s84, %s85
      %p89 = pneg %p83
      %p90 = scmp.eq.s32.totalorder %s23, 7
      %p91 = por %p89, %p90
      %p92 = scmp.ne.s32.totalorder %s84, %s87
      %p93 = scmp.eq.s32.totalorder %s23, 0
      %p94 = por %p92, %p93
      %p95 = scmp.ne.s32.totalorder %s84, %s87
      %p96 = scmp.eq.s32.totalorder %s28, 7
      %p97 = por %p95, %p96
      %p98 = scmp.ne.s32.totalorder %s87, %s88
      %p99 = scmp.eq.s32.totalorder %s28, 0
      %p100 = por %p98, %p99
      %p101 = scmp.ne.s32.totalorder %s87, %s88
      %p102 = scmp.eq.s32.totalorder %s29, 7
      %p103 = por %p101, %p102
      %p105 = scmp.ne.s32.totalorder %s88, %s104
      %p106 = scmp.eq.s32.totalorder %s29, 0
      %p107 = por %p105, %p106
      %s108 = ssub.s32 %s30, %s49
      %s109 = ssub.s32 %s31, %s45
      %s110 = sor.u32 %s108, %s109
      %p111 = scmp.eq.s32.totalorder %s110, 0
      %s113 = sadd.s32 %s112, 1
      %s114 = scalar_select %p111, %s112, %s113
      %p117 = pneg %p111
      %p118 = scmp.eq.s32.totalorder %s23, 7
      %p119 = por %p117, %p118
      %p120 = scmp.ne.s32.totalorder %s112, %s115
      %p121 = scmp.eq.s32.totalorder %s23, 0
      %p122 = por %p120, %p121
      %p123 = scmp.ne.s32.totalorder %s112, %s115
      %p124 = scmp.eq.s32.totalorder %s28, 7
      %p125 = por %p123, %p124
      %p126 = scmp.ne.s32.totalorder %s115, %s116
      %p127 = scmp.eq.s32.totalorder %s28, 0
      %p128 = por %p126, %p127
      %p129 = scmp.ne.s32.totalorder %s115, %s116
      %p130 = scmp.eq.s32.totalorder %s29, 7
      %p131 = por %p129, %p130
      %p133 = scmp.ne.s32.totalorder %s116, %s132
      %p134 = scmp.eq.s32.totalorder %s29, 0
      %p135 = por %p133, %p134
      %s136 = ssub.s32 %s30, %s49
      %s137 = ssub.s32 %s31, %s45
      %s138 = sor.u32 %s136, %s137
      %s139 = ssub.s32 %s32, %s41
      %s140 = sor.u32 %s138, %s139
      %p141 = scmp.eq.s32.totalorder %s140, 0
      %s143 = sadd.s32 %s142, 1
      %s144 = scalar_select %p141, %s142, %s143
      %p147 = pneg %p141
      %p148 = scmp.eq.s32.totalorder %s23, 7
      %p149 = por %p147, %p148
      %p150 = scmp.ne.s32.totalorder %s142, %s145
      %p151 = scmp.eq.s32.totalorder %s23, 0
      %p152 = por %p150, %p151
      %p153 = scmp.ne.s32.totalorder %s142, %s145
      %p154 = scmp.eq.s32.totalorder %s28, 7
      %p155 = por %p153, %p154
      %p156 = scmp.ne.s32.totalorder %s145, %s146
      %p157 = scmp.eq.s32.totalorder %s28, 0
      %p158 = por %p156, %p157
      %p159 = scmp.ne.s32.totalorder %s145, %s146
      %p160 = scmp.eq.s32.totalorder %s29, 7
      %p161 = por %p159, %p160
      %p163 = scmp.ne.s32.totalorder %s146, %s162
      %p164 = scmp.eq.s32.totalorder %s29, 0
      %p165 = por %p163, %p164
      %s166 = ssub.s32 %s30, %s49
      %s167 = ssub.s32 %s31, %s45
      %s168 = sor.u32 %s166, %s167
      %s169 = ssub.s32 %s32, %s41
      %s170 = sor.u32 %s168, %s169
      %p171 = scmp.eq.s32.totalorder %s170, 0
      %s173 = sadd.s32 %s172, 1
      %s174 = scalar_select %p171, %s172, %s173
      %p177 = pneg %p171
      %p178 = scmp.eq.s32.totalorder %s23, 7
      %p179 = por %p177, %p178
      %p180 = scmp.ne.s32.totalorder %s172, %s175
      %p181 = scmp.eq.s32.totalorder %s23, 0
      %p182 = por %p180, %p181
      %p183 = scmp.ne.s32.totalorder %s172, %s175
      %p184 = scmp.eq.s32.totalorder %s28, 7
      %p185 = por %p183, %p184
      %p186 = scmp.ne.s32.totalorder %s175, %s176
      %p187 = scmp.eq.s32.totalorder %s28, 0
      %p188 = por %p186, %p187
      %p189 = scmp.ne.s32.totalorder %s175, %s176
      %p190 = scmp.eq.s32.totalorder %s29, 7
      %p191 = por %p189, %p190
      %p193 = scmp.ne.s32.totalorder %s176, %s192
      %p194 = scmp.eq.s32.totalorder %s29, 0
      %p195 = por %p193, %p194
      %p196 = scmp.le.s32.totalorder 1, %s23
      %p197 = scmp.lt.s32.totalorder %s23, 9
      %p198 = pnand %p196, %p197
      %p199 = pneg %p198
      // Predicated region
      $region9: #{scale_dot_product_attention.1} parent=5 // pred_check
        _
      $region10: #{scale_dot_product_attention.1} parent=5 // pred_check_branch
        %201 = sbr.rel (%p198) target = $region12
      $region11: #{scale_dot_product_attention.1} parent=5 // pred_region
        %s202 = ssub.s32 %s23, 1
      $region12: #{scale_dot_product_attention.1} parent=5 // pred_fallthru
        _
      %p203 = scmp.lt.s32.totalorder %s23, 8
      // Predicated region
      $region13: #{scale_dot_product_attention.1} parent=5 // pred_check
        %p204 = pneg %p203
      $region14: #{scale_dot_product_attention.1} parent=5 // pred_check_branch
        %206 = sbr.rel (%p204) target = $region16
      $region15: #{scale_dot_product_attention.1} parent=5 // pred_region
        // Predicated region
        $region17: #{scale_dot_product_attention.1} parent=15 // pred_check
          %p207 = pneg %p66
        $region18: #{scale_dot_product_attention.1} parent=15 // pred_check_branch
          %209 = sbr.rel (%p207) target = $region20
        $region19: #{scale_dot_product_attention.1} parent=15 // pred_region
          %s210 = sand.u32 %s56, 1
          %s211 = scalar_lea.sflag [#allocation3], %s210
          %s212 = sand.u32 %s56, 1
          %s213 = smul.addr %s212, 8
          %s214 = scalar_lea.vmem [#allocation2], %s213
          %s216 = ssub.s32 128, 128
          %217 = vsyncadd %s211, %s216
          %s218 = sadd.s32 %s32, %s31
          %s219 = smul.addr %s30, 4
          %s220 = sadd.s32 %s218, %s219
          %s221 = smul.addr %s220, 128
          %s222 = scalar_lea.hbm %s0, %s221
          %s224 = sshll.u32 %s214, 4
          %s225 = int_to_ptr.vmem [resolvable:$true] %s224
          %227 = dma.hbm_to_vmem [thread:$0]  %s222, 128, %s225, %s211
        $region20: #{scale_dot_product_attention.1} parent=15 // pred_fallthru
          _
        // Predicated region
        $region21: #{scale_dot_product_attention.1} parent=15 // pred_check
          %p228 = pneg %p94
        $region22: #{scale_dot_product_attention.1} parent=15 // pred_check_branch
          %230 = sbr.rel (%p228) target = $region24
        $region23: #{scale_dot_product_attention.1} parent=15 // pred_region
          %s231 = sand.u32 %s23, 1
          %s232 = scalar_lea.sflag [#allocation6], %s231
          %s233 = sand.u32 %s84, 1
          %s234 = smul.addr %s233, 8
          %s235 = scalar_lea.vmem [#allocation5], %s234
          %s237 = ssub.s32 128, 128
          %238 = vsyncadd %s232, %s237
          %s239 = smul.addr %s30, 4
          %s240 = sadd.s32 %s31, %s239
          %s241 = smul.addr %s240, 128
          %s242 = scalar_lea.hbm %s1, %s241
          %s244 = sshll.u32 %s235, 4
          %s245 = int_to_ptr.vmem [resolvable:$true] %s244
          %247 = dma.hbm_to_vmem [thread:$0]  %s242, 128, %s245, %s232
        $region24: #{scale_dot_product_attention.1} parent=15 // pred_fallthru
          _
        // Predicated region
        $region25: #{scale_dot_product_attention.1} parent=15 // pred_check
          %p248 = pneg %p122
        $region26: #{scale_dot_product_attention.1} parent=15 // pred_check_branch
          %250 = sbr.rel (%p248) target = $region28
        $region27: #{scale_dot_product_attention.1} parent=15 // pred_region
          %s251 = sand.u32 %s23, 1
          %s252 = scalar_lea.sflag [#allocation6], %s251
          %s253 = sand.u32 %s112, 1
          %s254 = smul.addr %s253, 8
          %s255 = scalar_lea.vmem [#allocation7], %s254
          %s257 = ssub.s32 128, 128
          %258 = vsyncadd %s252, %s257
          %s259 = smul.addr %s30, 4
          %s260 = sadd.s32 %s31, %s259
          %s261 = smul.addr %s260, 128
          %s262 = scalar_lea.hbm %s2, %s261
          %s264 = sshll.u32 %s255, 4
          %s265 = int_to_ptr.vmem [resolvable:$true] %s264
          %267 = dma.hbm_to_vmem [thread:$0]  %s262, 128, %s265, %s252
        $region28: #{scale_dot_product_attention.1} parent=15 // pred_fallthru
          _
      $region16: #{scale_dot_product_attention.1} parent=5 // pred_fallthru
        _
      %p268 = scmp.le.s32.totalorder 1, %s23
      %p269 = scmp.lt.s32.totalorder %s23, 9
      %p270 = pnand %p268, %p269
      %p271 = pneg %p270
      // Predicated region
      $region29: #{scale_dot_product_attention.1} parent=5 // pred_check
        _
      $region30: #{scale_dot_product_attention.1} parent=5 // pred_check_branch
        %273 = sbr.rel (%p270) target = $region32
      $region31: #{scale_dot_product_attention.1} parent=5 // pred_region
        %s274 = ssub.s32 %s23, 1
        %s275 = sand.u32 %s59, 1
        %s276 = scalar_lea.sflag [#allocation3], %s275
        %s277 = sand.u32 %s59, 1
        %s278 = smul.addr %s277, 8
        %s279 = scalar_lea.vmem [#allocation2], %s278
        // Predicated region
        $region33: #{scale_dot_product_attention.1} parent=31 // pred_check
          %p280 = pneg %p72
        $region34: #{scale_dot_product_attention.1} parent=31 // pred_check_branch
          %282 = sbr.rel (%p280) target = $region36
        $region35: #{scale_dot_product_attention.1} parent=31 // pred_region
          %283 = dma.done %s276, 128
        $region36: #{scale_dot_product_attention.1} parent=31 // pred_fallthru
          _
        %s284 = sand.u32 %s28, 1
        %s285 = scalar_lea.sflag [#allocation6], %s284
        %s286 = sand.u32 %s87, 1
        %s287 = smul.addr %s286, 8
        %s288 = scalar_lea.vmem [#allocation5], %s287
        // Predicated region
        $region37: #{scale_dot_product_attention.1} parent=31 // pred_check
          %p289 = pneg %p100
        $region38: #{scale_dot_product_attention.1} parent=31 // pred_check_branch
          %291 = sbr.rel (%p289) target = $region40
        $region39: #{scale_dot_product_attention.1} parent=31 // pred_region
          %292 = dma.done %s285, 128
        $region40: #{scale_dot_product_attention.1} parent=31 // pred_fallthru
          _
        %s293 = sand.u32 %s28, 1
        %s294 = scalar_lea.sflag [#allocation6], %s293
        %s295 = sand.u32 %s115, 1
        %s296 = smul.addr %s295, 8
        %s297 = scalar_lea.vmem [#allocation7], %s296
        // Predicated region
        $region41: #{scale_dot_product_attention.1} parent=31 // pred_check
          %p298 = pneg %p128
        $region42: #{scale_dot_product_attention.1} parent=31 // pred_check_branch
          %300 = sbr.rel (%p298) target = $region44
        $region43: #{scale_dot_product_attention.1} parent=31 // pred_region
          %301 = dma.done %s294, 128
        $region44: #{scale_dot_product_attention.1} parent=31 // pred_fallthru
          _
        %s302 = sand.u32 %s59, 1
        %s303 = scalar_lea.sflag [#allocation3], %s302
        %s304 = sand.u32 %s59, 1
        %s305 = smul.addr %s304, 8
        %s306 = scalar_lea.vmem [#allocation2], %s305
        %p307 = pneg %p72
        %p308 = pneg %p69
        %s309 = sand.u32 %s28, 1
        %s310 = scalar_lea.sflag [#allocation6], %s309
        %s311 = sand.u32 %s87, 1
        %s312 = smul.addr %s311, 8
        %s313 = scalar_lea.vmem [#allocation5], %s312
        %p314 = pneg %p100
        %p315 = pneg %p97
        %s316 = sand.u32 %s28, 1
        %s317 = scalar_lea.sflag [#allocation6], %s316
        %s318 = sand.u32 %s115, 1
        %s319 = smul.addr %s318, 8
        %s320 = scalar_lea.vmem [#allocation7], %s319
        %p321 = pneg %p128
        %p322 = pneg %p125
        %p323 = pneg %p158
        %p324 = pneg %p155
        %s325 = sand.u32 %s145, 1
        %s326 = scalar_lea.sflag [#allocation4], %s325
        %s327 = sand.u32 %s145, 1
        %s328 = smul.addr %s327, 8
        %s329 = scalar_lea.vmem [#allocation8], %s328
        %p330 = pneg %p188
        %p331 = pneg %p185
        %s332 = sand.u32 %s175, 1
        %s333 = scalar_lea.sflag [#allocation10], %s332
        %s334 = sand.u32 %s175, 1
        %s335 = smul.addr %s334, 8
        %s336 = scalar_lea.vmem [#allocation9], %s335
        %v338 = vld [vmem:[%s279] sm:$0xff]
        %v339 = vld [vmem:[%s288] sm:$0xff]
        %v340 = vld [vmem:[%s297] sm:$0xff]
        %v341 = vmul.f32 %v338, 0.17677669
        %v342 = vpack.c.bf16 %v341, %v341
        %v343 = vpack.c.bf16 %v339, %v339
        %vm344 = vcmask 261120
        %v346 = vsel %vm344, %v342, 0
        %v349 = vsel %vm344, %v343, 0
        %351 = vmatprep.subr.bf16.mxu0 0
        %352 = vmatpush1.bf16.xpose.msra.mxu0 %v349
        %353 = vmatprep.subr.bf16.mxu0 0
        %354 = vmatpush1.bf16.xpose.msra.mxu0 0
        %355 = vmatprep.subr.bf16.mxu0 0
        %356 = vmatpush1.bf16.xpose.msra.mxu0 0
        %357 = vmatprep.subr.bf16.mxu0 0
        %358 = vmatpush1.bf16.xpose.msra.mxu0 0
        %359 = vmatprep.subr.bf16.mxu0 0
        %360 = vmatpush1.bf16.xpose.msra.mxu0 0
        %361 = vmatprep.subr.bf16.mxu0 0
        %362 = vmatpush1.bf16.xpose.msra.mxu0 0
        %363 = vmatprep.subr.bf16.mxu0 0
        %364 = vmatpush1.bf16.xpose.msra.mxu0 0
        %365 = vmatprep.subr.bf16.mxu0 0
        %366 = vmatpush1.bf16.xpose.msra.mxu0 0
        %367 = vmatprep.subr.bf16.mxu0 0
        %368 = vmatpush1.bf16.xpose.msra.mxu0 0
        %369 = vmatprep.subr.bf16.mxu0 0
        %370 = vmatpush1.bf16.xpose.msra.mxu0 0
        %371 = vmatprep.subr.bf16.mxu0 0
        %372 = vmatpush1.bf16.xpose.msra.mxu0 0
        %373 = vmatprep.subr.bf16.mxu0 0
        %374 = vmatpush1.bf16.xpose.msra.mxu0 0
        %375 = vmatprep.subr.bf16.mxu0 0
        %376 = vmatpush1.bf16.xpose.msra.mxu0 0
        %377 = vmatprep.subr.bf16.mxu0 0
        %378 = vmatpush1.bf16.xpose.msra.mxu0 0
        %379 = vmatprep.subr.bf16.mxu0 0
        %380 = vmatpush1.bf16.xpose.msra.mxu0 0
        %381 = vmatprep.subr.bf16.mxu0 0
        %382 = vmatpush1.bf16.xpose.msra.mxu0 0
        %383 = vmatprep.mubr.bf16.mxu0 0
        %384 = vmatmul.mubr.bf16.gmra.mrb[0].mxu0 %v346
        %v385 = vpop.f32.mrb[0].mxu0
        %v386 = vadd.f32 0.0, %v385
        %v387 = vpop.f32.mrb[0].mxu0
        %v388 = vpop.f32.mrb[0].mxu0
        %v389 = vpop.f32.mrb[0].mxu0
        %390 = vdwg.mxu0
        %vm391 = vcmask 64512
        %v392 = vsel %vm391, %v386, -inf
        %393 = vmax.xlane.f32.xlu0 %v392
        %v394 = vpop.xlane.xlu0 %393
        %v395 = vsub.f32 %v386, %v394
        %v396 = vmul.f32 %v395, 1.442695
        %v397 = vpow.pop %v396
        %v398 = vsel %vm391, %v397, 0.0
        %399 = vadd.xlane.f32.xlu0 %v398
        %v400 = vpop.xlane.xlu0 %399
        %v401 = vrcp.pop %v400
        %v402 = vmul.f32 %v397, %v401
        %v403 = vpack.c.bf16 %v402, %v402
        %v404 = vpack.c.bf16 %v340, %v340
        %v406 = vsel %vm391, %v403, 0
        %vm408 = vcmask 1043456
        %v410 = vsel %vm408, %v404, 0
        %412 = vmatprep.subr.bf16.mxu0 0
        %413 = vmatpush1.bf16.msra.mxu0 %v410
        %414 = vmatprep.subr.bf16.mxu0 0
        %415 = vmatpush1.bf16.msra.mxu0 0
        %416 = vmatprep.subr.bf16.mxu0 0
        %417 = vmatpush1.bf16.msra.mxu0 0
        %418 = vmatprep.subr.bf16.mxu0 0
        %419 = vmatpush1.bf16.msra.mxu0 0
        %420 = vmatprep.subr.bf16.mxu0 0
        %421 = vmatpush1.bf16.msra.mxu0 0
        %422 = vmatprep.subr.bf16.mxu0 0
        %423 = vmatpush1.bf16.msra.mxu0 0
        %424 = vmatprep.subr.bf16.mxu0 0
        %425 = vmatpush1.bf16.msra.mxu0 0
        %426 = vmatprep.subr.bf16.mxu0 0
        %427 = vmatpush1.bf16.msra.mxu0 0
        %428 = vmatprep.subr.bf16.mxu0 0
        %429 = vmatpush1.bf16.msra.mxu0 0
        %430 = vmatprep.subr.bf16.mxu0 0
        %431 = vmatpush1.bf16.msra.mxu0 0
        %432 = vmatprep.subr.bf16.mxu0 0
        %433 = vmatpush1.bf16.msra.mxu0 0
        %434 = vmatprep.subr.bf16.mxu0 0
        %435 = vmatpush1.bf16.msra.mxu0 0
        %436 = vmatprep.subr.bf16.mxu0 0
        %437 = vmatpush1.bf16.msra.mxu0 0
        %438 = vmatprep.subr.bf16.mxu0 0
        %439 = vmatpush1.bf16.msra.mxu0 0
        %440 = vmatprep.subr.bf16.mxu0 0
        %441 = vmatpush1.bf16.msra.mxu0 0
        %442 = vmatprep.subr.bf16.mxu0 0
        %443 = vmatpush1.bf16.msra.mxu0 0
        %444 = vmatprep.mubr.bf16.mxu0 0
        %445 = vmatmul.mubr.bf16.gmra.mrb[0].mxu0 %v406
        %v446 = vpop.f32.mrb[0].mxu0
        %v447 = vadd.f32 0.0, %v446
        %v448 = vpop.f32.mrb[0].mxu0
        %v449 = vpop.f32.mrb[0].mxu0
        %v450 = vpop.f32.mrb[0].mxu0
        %451 = vdwg.mxu0
        %452 = vst.msk [vmem:[%s329] sm:$0xff] %vm344, %v447
        %453 = vst.msk [vmem:[%s336] sm:$0xff] %vm391, %v402
        %s454 = sand.u32 %s145, 1
        %s455 = scalar_lea.sflag [#allocation4], %s454
        %s456 = sand.u32 %s145, 1
        %s457 = smul.addr %s456, 8
        %s458 = scalar_lea.vmem [#allocation8], %s457
        %s459 = sand.u32 %s175, 1
        %s460 = scalar_lea.sflag [#allocation10], %s459
        %s461 = sand.u32 %s175, 1
        %s462 = smul.addr %s461, 8
        %s463 = scalar_lea.vmem [#allocation9], %s462
        // Predicated region
        $region45: #{scale_dot_product_attention.1} parent=31 // pred_check
          %p464 = pneg %p155
        $region46: #{scale_dot_product_attention.1} parent=31 // pred_check_branch
          %466 = sbr.rel (%p464) target = $region48
        $region47: #{scale_dot_product_attention.1} parent=31 // pred_region
          %s468 = ssub.s32 128, 128
          %469 = vsyncadd %s455, %s468
          %s470 = sadd.s32 %s35, %s34
          %s471 = smul.addr %s33, 4
          %s472 = sadd.s32 %s470, %s471
          %s473 = smul.addr %s472, 128
          %s474 = scalar_lea.hbm %s3, %s473
          %s476 = sshll.u32 %s458, 4
          %s477 = int_to_ptr.vmem [resolvable:$true] %s476
          %479 = dma.vmem_to_hbm [thread:$0]  %s477, 128, %s474, %s455
        $region48: #{scale_dot_product_attention.1} parent=31 // pred_fallthru
          _
        // Predicated region
        $region49: #{scale_dot_product_attention.1} parent=31 // pred_check
          %p480 = pneg %p185
        $region50: #{scale_dot_product_attention.1} parent=31 // pred_check_branch
          %482 = sbr.rel (%p480) target = $region52
        $region51: #{scale_dot_product_attention.1} parent=31 // pred_region
          %s484 = ssub.s32 128, 128
          %485 = vsyncadd %s460, %s484
          %s486 = sadd.s32 %s35, %s34
          %s487 = smul.addr %s33, 4
          %s488 = sadd.s32 %s486, %s487
          %s489 = smul.addr %s488, 128
          %s490 = scalar_lea.hbm %s4, %s489
          %s492 = sshll.u32 %s463, 4
          %s493 = int_to_ptr.vmem [resolvable:$true] %s492
          %495 = dma.vmem_to_hbm [thread:$0]  %s493, 128, %s490, %s460
        $region52: #{scale_dot_product_attention.1} parent=31 // pred_fallthru
          _
      $region32: #{scale_dot_product_attention.1} parent=5 // pred_fallthru
        _
      %p496 = scmp.le.s32.totalorder 2, %s23
      // Predicated region
      $region53: #{scale_dot_product_attention.1} parent=5 // pred_check
        %p497 = pneg %p496
      $region54: #{scale_dot_product_attention.1} parent=5 // pred_check_branch
        %499 = sbr.rel (%p497) target = $region56
      $region55: #{scale_dot_product_attention.1} parent=5 // pred_region
        %s500 = ssub.s32 %s23, 2
        // Predicated region
        $region57: #{scale_dot_product_attention.1} parent=55 // pred_check
          %p501 = pneg %p161
        $region58: #{scale_dot_product_attention.1} parent=55 // pred_check_branch
          %503 = sbr.rel (%p501) target = $region60
        $region59: #{scale_dot_product_attention.1} parent=55 // pred_region
          %s504 = sand.u32 %s146, 1
          %s505 = scalar_lea.sflag [#allocation4], %s504
          %s506 = sand.u32 %s146, 1
          %s507 = smul.addr %s506, 8
          %s508 = scalar_lea.vmem [#allocation8], %s507
          %509 = dma.done %s505, 128
        $region60: #{scale_dot_product_attention.1} parent=55 // pred_fallthru
          _
        // Predicated region
        $region61: #{scale_dot_product_attention.1} parent=55 // pred_check
          %p510 = pneg %p191
        $region62: #{scale_dot_product_attention.1} parent=55 // pred_check_branch
          %512 = sbr.rel (%p510) target = $region64
        $region63: #{scale_dot_product_attention.1} parent=55 // pred_region
          %s513 = sand.u32 %s176, 1
          %s514 = scalar_lea.sflag [#allocation10], %s513
          %s515 = sand.u32 %s176, 1
          %s516 = smul.addr %s515, 8
          %s517 = scalar_lea.vmem [#allocation9], %s516
          %518 = dma.done %s514, 128
        $region64: #{scale_dot_product_attention.1} parent=55 // pred_fallthru
          _
      $region56: #{scale_dot_product_attention.1} parent=5 // pred_fallthru
        _
    $region6: #{scale_dot_product_attention.1} parent=1 // loop_footer
      %s27 = sadd.s32 1, %s23
    $region7: #{scale_dot_product_attention.1} parent=1 // loop_footer_branch
      %22 = sbr.rel target = $region3
    $region8: #{scale_dot_product_attention.1} parent=1 // loop_exit
      _
    %519 = vsyncpa [#allocation3], 1
    %s520 = scalar_lea.sflag [#allocation3], 1
    %521 = vsyncpa %s520, 1
    %522 = vsyncpa [#allocation6], 1
    %s523 = scalar_lea.sflag [#allocation6], 1
    %524 = vsyncpa %s523, 1
    %525 = vsyncpa [#allocation4], 1
    %s526 = scalar_lea.sflag [#allocation4], 1
    %527 = vsyncpa %s526, 1
    %528 = vsyncpa [#allocation10], 1
    %s529 = scalar_lea.sflag [#allocation10], 1
    %530 = vsyncpa %s529, 1

</llo_original>
